<compile_context>
chip_gen: v7x
topology: tpu7x:2x2x1
jax: 0.10.0
libtpu: 0.0.40
codegen_flags: <defaults>
</compile_context>

<pallas_src>
import functools

import jax
import jax.numpy as jnp
from jax.experimental import pallas as pl
from jax.experimental.pallas import tpu as pltpu


_LANE = 128
# Budget for the auto-pipelined (double-buffered) blocks; safe on every
# generation (v5e/v6e: 128 MiB VMEM, v7x: 64 MiB per TensorCore).
_VMEM_PIPELINE_BUDGET = 24 * 1024 * 1024
_VMEM_LIMIT_BYTES = 48 * 1024 * 1024


def _round_up(x, m):
    return (x + m - 1) // m * m


def _pick_batch_block(B, bytes_per_batch, budget):
    """Largest divisor of B under the VMEM budget, preferring >= 2 grid steps."""
    max_bt = max(1, budget // max(bytes_per_batch, 1))
    fits = [d for d in range(1, B + 1) if B % d == 0 and d <= max_bt]
    bt = max(fits) if fits else 1
    if B // bt < 2:                 # keep pipelining / multi-core grid steps
        two_plus = [d for d in fits if B // d >= 2]
        if two_plus:
            bt = max(two_plus)
    return bt


# ----------------------------------------------------------------------------
# Path 1: fused im2col-in-VMEM + single-dot projection (stride == 1).
# ----------------------------------------------------------------------------
def _fused_kernel(w_ref, x_ref, o_ref, col_ref, *, k, C, Cp, Wp, n, Bt):
    # w_ref:   (O, k*k*Cp)   projection (bf16), resident across the grid
    # x_ref:   (Bt, C, Sp)   padded batch images, spatial axis flattened
    # o_ref:   (Bt, O, n)    output rows incl. halo cols (stripped in wrapper)
    # col_ref: (k*k*Cp, n)   VMEM im2col staging buffer (never touches HBM)

    # Zero the staging buffer once so the (Cp - C) padding rows stay zero
    # (their weight columns are zero-padded too — belt and braces).
    @pl.when(pl.program_id(0) == 0)
    def _():
        col_ref[...] = jnp.zeros_like(col_ref)

    for b in range(Bt):
        # Stage the k*k shifted windows:
        #   col[(i*k + j)*Cp + c, ho*Wp + wo] = xp[c, ho + i, wo + j]
        # which is exactly the torch.unfold entry for kernel offset (i, j).
        for i in range(k):
            for j in range(k):
                off = i * Wp + j
                col_ref[pl.ds((i * k + j) * Cp, C), :] = x_ref[b, :, off:off + n]
        # One MXU contraction over K = k*k*Cp instead of k*k K=C dots
        # plus k*k full-width VPU accumulator adds.
        res = jnp.dot(w_ref[...], col_ref[...],
                      preferred_element_type=jnp.float32)
        # Single lane-dense store in the output dtype (no per-row masked vst).
        o_ref[b, :, :] = res.astype(o_ref.dtype)


def _proj_conv2d_fused(x, w, kernel_size, padding, compute_dtype, out_dtype):
    B, C, H, W = x.shape
    O = w.shape[0]
    k = kernel_size
    Hp, Wp = H + 2 * padding, W + 2 * padding
    Ho, Wo = Hp - k + 1, Wp - k + 1
    n = Ho * Wp                               # output row incl. (k-1) halo cols

    c_bytes = jnp.dtype(compute_dtype).itemsize
    o_bytes = jnp.dtype(out_dtype).itemsize

    # Flattened spatial axis padded so every shifted window slice (max start
    # (k-1)*Wp + (k-1), length Ho*Wp) stays in bounds, rounded to a lane
    # multiple for aligned DMAs.  This fixes the previous OOB slice.
    Sp = _round_up(Hp * Wp + (k - 1), _LANE)
    # Sublane-align each kernel-offset slab of the staging buffer (bf16 packs
    # 16 rows per tile) so its stores start on a tile-row boundary.
    Cp = _round_up(C, 16)

    # TODO(synk): fold the spatial zero-padding into the kernel (manual DMA of
    # interior rows into a zeroed VMEM scratch) to skip this HBM round trip.
    xp = jnp.pad(x, ((0, 0), (0, 0), (padding, padding), (padding, padding)))
    xp = xp.reshape(B, C, Hp * Wp)
    xp = jnp.pad(xp, ((0, 0), (0, 0), (0, Sp - Hp * Wp))).astype(compute_dtype)

    # (O, C*k*k) -> (O, k, k, C) -> zero-pad C->Cp -> (O, k*k*Cp) so that
    # column (i*k + j)*Cp + c matches torch.unfold's row c*k*k + i*k + j.
    w_kk = w.reshape(O, C, k, k).transpose(0, 2, 3, 1)
    w_kk = jnp.pad(w_kk, ((0, 0), (0, 0), (0, 0), (0, Cp - C)))
    w2 = w_kk.reshape(O, k * k * Cp).astype(compute_dtype)

    # Block several batch elements per grid step (amortizes ~0.35us/step
    # pipeline overhead) under a generation-safe VMEM budget.
    per_batch = 2 * C * Sp * c_bytes + 2 * O * n * o_bytes  # double-buffered
    Bt = _pick_batch_block(B, per_batch, _VMEM_PIPELINE_BUDGET)

    # TODO(synk): row-strip spatial tiling (with k-1 halo rows) for very large
    # images so the per-step block and the (O, n) dot result stay bounded on
    # v7x's 64 MiB VMEM.
    kernel = functools.partial(_fused_kernel, k=k, C=C, Cp=Cp, Wp=Wp, n=n, Bt=Bt)
    out = pl.pallas_call(
        kernel,
        out_shape=jax.ShapeDtypeStruct((B, O, n), out_dtype),
        grid_spec=pltpu.PrefetchScalarGridSpec(
            num_scalar_prefetch=0,
            grid=(B // Bt,),
            in_specs=[
                pl.BlockSpec((O, k * k * Cp), lambda b: (0, 0)),
                pl.BlockSpec((Bt, C, Sp), lambda b: (b, 0, 0)),
            ],
            out_specs=pl.BlockSpec((Bt, O, n), lambda b: (b, 0, 0)),
            scratch_shapes=[pltpu.VMEM((k * k * Cp, n), compute_dtype)],
        ),
        compiler_params=pltpu.CompilerParams(
            dimension_semantics=("parallel",),
            vmem_limit_bytes=_VMEM_LIMIT_BYTES,
        ),
    )(w2, xp)

    # Strip the (k-1) halo columns in the wrapper (cheap slice) so the kernel
    # store stays lane-dense.
    return out.reshape(B, O, Ho, Wp)[..., :Wo]


# ----------------------------------------------------------------------------
# Path 2: im2col in JAX + tiled projection matmul (general stride).
# ----------------------------------------------------------------------------
def _proj_matmul_kernel(w_ref, p_ref, o_ref):
    # w_ref: (O, K) resident; p_ref: (1, K, tn) patch tile; o_ref: (1, O, tn).
    o_ref[0] = jnp.dot(w_ref[...], p_ref[0],
                       preferred_element_type=jnp.float32).astype(o_ref.dtype)


def _unfold_nchw(x, kernel_size, stride, padding):
    """torch.nn.functional.unfold (square kernel): (B,C,H,W) -> (B,C*k*k,L)."""
    B, C, H, W = x.shape
    k = kernel_size
    xp = jnp.pad(x, ((0, 0), (0, 0), (padding, padding), (padding, padding)))
    Ho = (H + 2 * padding - k) // stride + 1
    Wo = (W + 2 * padding - k) // stride + 1
    cols = []
    for i in range(k):
        for j in range(k):
            cols.append(xp[:, :, i:i + stride * Ho:stride,
                            j:j + stride * Wo:stride])
    cols = jnp.stack(cols, axis=2)            # (B, C, k*k, Ho, Wo)
    return cols.reshape(B, C * k * k, Ho * Wo), Ho, Wo


def _proj_conv2d_im2col(x, w, kernel_size, stride, padding, compute_dtype,
                        out_dtype):
    # TODO(synk): extend the fused kernel to stride != 1 (strided row DMA into
    # a VMEM scratch) so the k*k im2col blow-up never materializes in HBM.
    B = x.shape[0]
    O, K = w.shape
    patches, Ho, Wo = _unfold_nchw(x, kernel_size, stride, padding)  # (B,K,L)
    L = patches.shape[-1]

    c_bytes = jnp.dtype(compute_dtype).itemsize
    o_bytes = jnp.dtype(out_dtype).itemsize

    # Pad L only to the next lane multiple, then pick the L tile as a divisor
    # of Lp (multiple of 128, <= 4096) under a generation-safe VMEM budget.
    Lp = _round_up(L, _LANE)
    per_col = 2 * K * c_bytes + 2 * O * o_bytes            # double-buffered
    cap = max(_LANE,
              min(4096, (_VMEM_PIPELINE_BUDGET // per_col) // _LANE * _LANE))
    m = Lp // _LANE
    best = 1
    for d in range(1, m + 1):
        if m % d == 0 and d * _LANE <= cap:
            best = d
    tn = best * _LANE

    if Lp != L:
        patches = jnp.pad(patches, ((0, 0), (0, 0), (0, Lp - L)))
    patches = patches.astype(compute_dtype)
    wq = w.astype(compute_dtype)

    out = pl.pallas_call(
        _proj_matmul_kernel,
        out_shape=jax.ShapeDtypeStruct((B, O, Lp), out_dtype),
        grid_spec=pltpu.PrefetchScalarGridSpec(
            num_scalar_prefetch=0,
            grid=(B, Lp // tn),
            in_specs=[
                pl.BlockSpec((O, K), lambda b, j: (0, 0)),
                pl.BlockSpec((1, K, tn), lambda b, j: (b, 0, j)),
            ],
            out_specs=pl.BlockSpec((1, O, tn), lambda b, j: (b, 0, j)),
        ),
        compiler_params=pltpu.CompilerParams(
            dimension_semantics=("parallel", "parallel"),
            vmem_limit_bytes=_VMEM_LIMIT_BYTES,
        ),
    )(wq, patches)
    return out[:, :, :L].reshape(B, O, Ho, Wo)


# ----------------------------------------------------------------------------
# Public forward.
# ----------------------------------------------------------------------------
def proj_conv2d(x, projection_matrix, kernel_size, stride=1, padding=0,
                compute_dtype=jnp.bfloat16, out_dtype=None):
    """ProjConv2D forward. x: (B, C, H, W) NCHW, projection: (O, C*k*k)."""
    if out_dtype is None:
        out_dtype = x.dtype        # caller's dtype (pass bf16 to halve writeback)
    if stride == 1:
        return _proj_conv2d_fused(x, projection_matrix, kernel_size, padding,
                                  compute_dtype, out_dtype)
    return _proj_conv2d_im2col(x, projection_matrix, kernel_size, stride,
                               padding, compute_dtype, out_dtype)


# ----------------------------------------------------------------------------
# Pure-JAX reference (same bf16-rounded inputs, f32 accumulation).
# ----------------------------------------------------------------------------
def _reference(x, w, kernel_size, stride, padding, compute_dtype):
    xq = x.astype(compute_dtype).astype(jnp.float32)
    wq = w.astype(compute_dtype).astype(jnp.float32)
    patches, Ho, Wo = _unfold_nchw(xq, kernel_size, stride, padding)
    ref = jnp.einsum("ok,bkl->bol", wq, patches)
    return ref.reshape(x.shape[0], w.shape[0], Ho, Wo)


# ----------------------------------------------------------------------------
if __name__ == "__main__":
    batch, in_channels, H, W = 2, 4, 16, 16
    out_channels, kernel_size = 8, 3

    key = jax.random.PRNGKey(0)
    kx, kw = jax.random.split(key)
    x = jax.random.normal(kx, (batch, in_channels, H, W), dtype=jnp.float32)
    projection_matrix = jax.random.normal(
        kw, (out_channels, in_channels * kernel_size * kernel_size),
        dtype=jnp.float32,
    )

    # Fused path (stride=1, padding=1).
    out1 = jax.block_until_ready(
        proj_conv2d(x, projection_matrix, kernel_size, stride=1, padding=1))
    ref1 = _reference(x, projection_matrix, kernel_size, 1, 1, jnp.bfloat16)
    assert out1.shape == (batch, out_channels, 16, 16), out1.shape
    assert jnp.allclose(out1.astype(jnp.float32), ref1, atol=2e-2, rtol=2e-2)

    # General-stride path (stride=2, padding=1).
    out2 = jax.block_until_ready(
        proj_conv2d(x, projection_matrix, kernel_size, stride=2, padding=1))
    ref2 = _reference(x, projection_matrix, kernel_size, 2, 1, jnp.bfloat16)
    assert out2.shape == (batch, out_channels, 8, 8), out2.shape
    assert jnp.allclose(out2.astype(jnp.float32), ref2, atol=2e-2, rtol=2e-2)

    print("KERNEL_OK")
</pallas_src>

<mosaic_0001>
module attributes {stable_mosaic.version = 11 : i64} {
  func.func @_fused_kernel(%arg0: i32, %arg1: memref<8x144xbf16, #tpu.memory_space<vmem>>, %arg2: memref<1x4x384xbf16, #tpu.memory_space<vmem>>, %arg3: memref<1x8x288xf32, #tpu.memory_space<vmem>>, %arg4: memref<144x288xbf16, #tpu.memory_space<vmem>>) attributes {dimension_semantics = [#tpu.dimension_semantics<parallel>], iteration_bounds = array<i64: 2>, scalar_prefetch = 0 : i64, scratch_operands = 1 : i64, tpu.core_type = #tpu.core_type<tc>, window_params = [{pipeline_mode = #tpu.pipeline_mode<synchronous>, transform_indices = @transform_0, window_bounds = array<i64: 8, 144>}, {transform_indices = @transform_1, window_bounds = array<i64: 1, 4, 384>}, {transform_indices = @transform_2, window_bounds = array<i64: 1, 8, 288>}]} {
    %c0_i32 = arith.constant 0 : i32
    %0 = arith.cmpi eq, %arg0, %c0_i32 : i32
    %1 = arith.extui %0 : i1 to i32
    %c0_i32_0 = arith.constant 0 : i32
    %2 = arith.cmpi ne, %1, %c0_i32_0 : i32
    scf.if %2 {
      %cst_36 = arith.constant 0.000000e+00 : bf16
      %36 = vector.broadcast %cst_36 : bf16 to vector<144x288xbf16>
      %c0_37 = arith.constant 0 : index
      %c0_38 = arith.constant 0 : index
      %37 = vector.load %arg4[%c0_37, %c0_38] : memref<144x288xbf16, #tpu.memory_space<vmem>>, vector<144x288xbf16>
      tpu.vector_store %arg4[%c0_37, %c0_38], %36 {strides = array<i32>} : memref<144x288xbf16, #tpu.memory_space<vmem>>, vector<144x288xbf16>,
    } else {
    }
    %c0 = arith.constant 0 : index
    %c0_1 = arith.constant 0 : index
    %c0_2 = arith.constant 0 : index
    %3 = vector.load %arg2[%c0, %c0_1, %c0_2] : memref<1x4x384xbf16, #tpu.memory_space<vmem>>, vector<1x4x288xbf16>
    %4 = vector.shape_cast %3 : vector<1x4x288xbf16> to vector<4x288xbf16>
    %c0_3 = arith.constant 0 : index
    %c0_4 = arith.constant 0 : index
    %5 = vector.load %arg4[%c0_3, %c0_4] : memref<144x288xbf16, #tpu.memory_space<vmem>>, vector<4x288xbf16>
    tpu.vector_store %arg4[%c0_3, %c0_4], %4 {strides = array<i32>} : memref<144x288xbf16, #tpu.memory_space<vmem>>, vector<4x288xbf16>,
    %c0_5 = arith.constant 0 : index
    %c0_6 = arith.constant 0 : index
    %c1 = arith.constant 1 : index
    %6 = vector.load %arg2[%c0_5, %c0_6, %c1] : memref<1x4x384xbf16, #tpu.memory_space<vmem>>, vector<1x4x288xbf16>
    %7 = vector.shape_cast %6 : vector<1x4x288xbf16> to vector<4x288xbf16>
    %c16 = arith.constant 16 : index
    %c0_7 = arith.constant 0 : index
    %8 = vector.load %arg4[%c16, %c0_7] : memref<144x288xbf16, #tpu.memory_space<vmem>>, vector<4x288xbf16>
    tpu.vector_store %arg4[%c16, %c0_7], %7 {strides = array<i32>} : memref<144x288xbf16, #tpu.memory_space<vmem>>, vector<4x288xbf16>,
    %c0_8 = arith.constant 0 : index
    %c0_9 = arith.constant 0 : index
    %c2 = arith.constant 2 : index
    %9 = vector.load %arg2[%c0_8, %c0_9, %c2] : memref<1x4x384xbf16, #tpu.memory_space<vmem>>, vector<1x4x288xbf16>
    %10 = vector.shape_cast %9 : vector<1x4x288xbf16> to vector<4x288xbf16>
    %c32 = arith.constant 32 : index
    %c0_10 = arith.constant 0 : index
    %11 = vector.load %arg4[%c32, %c0_10] : memref<144x288xbf16, #tpu.memory_space<vmem>>, vector<4x288xbf16>
    tpu.vector_store %arg4[%c32, %c0_10], %10 {strides = array<i32>} : memref<144x288xbf16, #tpu.memory_space<vmem>>, vector<4x288xbf16>,
    %c0_11 = arith.constant 0 : index
    %c0_12 = arith.constant 0 : index
    %c18 = arith.constant 18 : index
    %12 = vector.load %arg2[%c0_11, %c0_12, %c18] : memref<1x4x384xbf16, #tpu.memory_space<vmem>>, vector<1x4x288xbf16>
    %13 = vector.shape_cast %12 : vector<1x4x288xbf16> to vector<4x288xbf16>
    %c48 = arith.constant 48 : index
    %c0_13 = arith.constant 0 : index
    %14 = vector.load %arg4[%c48, %c0_13] : memref<144x288xbf16, #tpu.memory_space<vmem>>, vector<4x288xbf16>
    tpu.vector_store %arg4[%c48, %c0_13], %13 {strides = array<i32>} : memref<144x288xbf16, #tpu.memory_space<vmem>>, vector<4x288xbf16>,
    %c0_14 = arith.constant 0 : index
    %c0_15 = arith.constant 0 : index
    %c19 = arith.constant 19 : index
    %15 = vector.load %arg2[%c0_14, %c0_15, %c19] : memref<1x4x384xbf16, #tpu.memory_space<vmem>>, vector<1x4x288xbf16>
    %16 = vector.shape_cast %15 : vector<1x4x288xbf16> to vector<4x288xbf16>
    %c64 = arith.constant 64 : index
    %c0_16 = arith.constant 0 : index
    %17 = vector.load %arg4[%c64, %c0_16] : memref<144x288xbf16, #tpu.memory_space<vmem>>, vector<4x288xbf16>
    tpu.vector_store %arg4[%c64, %c0_16], %16 {strides = array<i32>} : memref<144x288xbf16, #tpu.memory_space<vmem>>, vector<4x288xbf16>,
    %c0_17 = arith.constant 0 : index
    %c0_18 = arith.constant 0 : index
    %c20 = arith.constant 20 : index
    %18 = vector.load %arg2[%c0_17, %c0_18, %c20] : memref<1x4x384xbf16, #tpu.memory_space<vmem>>, vector<1x4x288xbf16>
    %19 = vector.shape_cast %18 : vector<1x4x288xbf16> to vector<4x288xbf16>
    %c80 = arith.constant 80 : index
    %c0_19 = arith.constant 0 : index
    %20 = vector.load %arg4[%c80, %c0_19] : memref<144x288xbf16, #tpu.memory_space<vmem>>, vector<4x288xbf16>
    tpu.vector_store %arg4[%c80, %c0_19], %19 {strides = array<i32>} : memref<144x288xbf16, #tpu.memory_space<vmem>>, vector<4x288xbf16>,
    %c0_20 = arith.constant 0 : index
    %c0_21 = arith.constant 0 : index
    %c36 = arith.constant 36 : index
    %21 = vector.load %arg2[%c0_20, %c0_21, %c36] : memref<1x4x384xbf16, #tpu.memory_space<vmem>>, vector<1x4x288xbf16>
    %22 = vector.shape_cast %21 : vector<1x4x288xbf16> to vector<4x288xbf16>
    %c96 = arith.constant 96 : index
    %c0_22 = arith.constant 0 : index
    %23 = vector.load %arg4[%c96, %c0_22] : memref<144x288xbf16, #tpu.memory_space<vmem>>, vector<4x288xbf16>
    tpu.vector_store %arg4[%c96, %c0_22], %22 {strides = array<i32>} : memref<144x288xbf16, #tpu.memory_space<vmem>>, vector<4x288xbf16>,
    %c0_23 = arith.constant 0 : index
    %c0_24 = arith.constant 0 : index
    %c37 = arith.constant 37 : index
    %24 = vector.load %arg2[%c0_23, %c0_24, %c37] : memref<1x4x384xbf16, #tpu.memory_space<vmem>>, vector<1x4x288xbf16>
    %25 = vector.shape_cast %24 : vector<1x4x288xbf16> to vector<4x288xbf16>
    %c112 = arith.constant 112 : index
    %c0_25 = arith.constant 0 : index
    %26 = vector.load %arg4[%c112, %c0_25] : memref<144x288xbf16, #tpu.memory_space<vmem>>, vector<4x288xbf16>
    tpu.vector_store %arg4[%c112, %c0_25], %25 {strides = array<i32>} : memref<144x288xbf16, #tpu.memory_space<vmem>>, vector<4x288xbf16>,
    %c0_26 = arith.constant 0 : index
    %c0_27 = arith.constant 0 : index
    %c38 = arith.constant 38 : index
    %27 = vector.load %arg2[%c0_26, %c0_27, %c38] : memref<1x4x384xbf16, #tpu.memory_space<vmem>>, vector<1x4x288xbf16>
    %28 = vector.shape_cast %27 : vector<1x4x288xbf16> to vector<4x288xbf16>
    %c128 = arith.constant 128 : index
    %c0_28 = arith.constant 0 : index
    %29 = vector.load %arg4[%c128, %c0_28] : memref<144x288xbf16, #tpu.memory_space<vmem>>, vector<4x288xbf16>
    tpu.vector_store %arg4[%c128, %c0_28], %28 {strides = array<i32>} : memref<144x288xbf16, #tpu.memory_space<vmem>>, vector<4x288xbf16>,
    %c0_29 = arith.constant 0 : index
    %c0_30 = arith.constant 0 : index
    %30 = vector.load %arg1[%c0_29, %c0_30] : memref<8x144xbf16, #tpu.memory_space<vmem>>, vector<8x144xbf16>
    %c0_31 = arith.constant 0 : index
    %c0_32 = arith.constant 0 : index
    %31 = vector.load %arg4[%c0_31, %c0_32] : memref<144x288xbf16, #tpu.memory_space<vmem>>, vector<144x288xbf16>
    %cst = arith.constant dense<0.000000e+00> : vector<8x288xf32>
    %32 = tpu.matmul %30, %31, %cst {dimension_numbers = #tpu.dot_dimension_numbers<[1], [0], [0], [1], [0, 0, 1, 1], [], []>} : vector<8x144xbf16>, vector<144x288xbf16>, vector<8x288xf32> -> vector<8x288xf32>
    %c0_33 = arith.constant 0 : index
    %c0_34 = arith.constant 0 : index
    %c0_35 = arith.constant 0 : index
    %33 = vector.load %arg3[%c0_33, %c0_34, %c0_35] : memref<1x8x288xf32, #tpu.memory_space<vmem>>, vector<1x8x288xf32>
    %34 = vector.shape_cast %33 : vector<1x8x288xf32> to vector<8x288xf32>
    %35 = vector.shape_cast %32 : vector<8x288xf32> to vector<1x8x288xf32>
    tpu.vector_store %arg3[%c0_33, %c0_34, %c0_35], %35 {strides = array<i32>} : memref<1x8x288xf32, #tpu.memory_space<vmem>>, vector<1x8x288xf32>,
    return
  }
  func.func @transform_0(%arg0: i32) -> (i32, i32) {
    %c0_i32 = arith.constant 0 : i32
    %c0_i32_0 = arith.constant 0 : i32
    %c0_i32_1 = arith.constant 0 : i32
    return %c0_i32, %c0_i32_0 : i32, i32
  }
  func.func @transform_1(%arg0: i32) -> (i32, i32, i32) {
    %c0_i32 = arith.constant 0 : i32
    %c0_i32_0 = arith.constant 0 : i32
    %c0_i32_1 = arith.constant 0 : i32
    return %arg0, %c0_i32, %c0_i32_0 : i32, i32, i32
  }
  func.func @transform_2(%arg0: i32) -> (i32, i32, i32) {
    %c0_i32 = arith.constant 0 : i32
    %c0_i32_0 = arith.constant 0 : i32
    %c0_i32_1 = arith.constant 0 : i32
    return %arg0, %c0_i32, %c0_i32_0 : i32, i32, i32
  }
}

</mosaic_0001>

<llo_original>
// kernel: tpu_custom_call.1
$region0: #{tpu_custom_call.1}
  #allocation0 [shape = 'u32[]', space=smem, size = 0x4, offset = 0x4, fixed_abs, tag = 'smem constant byte address 0x4 - core index']
  #allocation1 [shape = 'u32[144,128]{1,0:T(1,128)}', space=vmem, size = 0x12000, scoped, tag = 'internal scratch']
  #allocation2 [shape = 'bf16[144,288]{1,0:T(16,128)(2,1)}', space=vmem, size = 0x1b000, scoped, tag = 'scratch operand']
  %s0 = inlined_call_operand.hbm [shape: bf16[8,144], index: 0, kind: input, shape index: {}]
  %s1 = inlined_call_operand.hbm [shape: bf16[2,4,384], index: 1, kind: input, shape index: {}]
  %s2 = inlined_call_operand.hbm [shape: f32[2,8,288], index: 2, kind: output, shape index: {}]
  %s3 = sld [smem:[#allocation0]]
  $region53: #{tpu_custom_call.1} parent=0
    _
  %s5 = ssub.s32 1, %s3
  %s6 = scalar_select 0, %s5, %s3
  $region1: #{tpu_custom_call.1} parent=0
    #allocation3 [shape = 'u8[4096]{0}', space=vmem, size = 0x1000, scoped, tag = 'input window, operand 0, single buffered']
    #allocation4 [shape = 's32[2]{0}', space=sflag, size = 0x8, scoped, tag = 'scoped memory for tpu_custom_call.1']
    #allocation5 [shape = 's32[2]{0}', space=sflag, size = 0x8, scoped, tag = 'scoped memory for tpu_custom_call.1']
    #allocation6 [shape = 'u8[6144]{0}', space=vmem, size = 0x1800, scoped, tag = 'input window, operand 1']
    #allocation7 [shape = 's32[2]{0}', space=sflag, size = 0x8, scoped, tag = 'scoped memory for tpu_custom_call.1']
    #allocation8 [shape = 'u8[24576]{0}', space=vmem, size = 0x6000, scoped, tag = 'output window, operand 0']
    %7 = vsyncpa [#allocation4], 0
    %8 = vsyncpa [#allocation7], 0
    %s9 = scalar_lea.sflag [#allocation7], 1
    %10 = vsyncpa %s9, 0
    %11 = vsyncpa [#allocation5], 0
    %s12 = scalar_lea.sflag [#allocation5], 1
    %13 = vsyncpa %s12, 0
    loop: start=0, step=1, limit=4
    $region2: #{tpu_custom_call.1} parent=1 // loop_pre_header
      _
    $region3: #{tpu_custom_call.1} parent=1 // loop_header
      %s15 = sphi 0, %s19
      %p16 = scmp.ge.s32.totalorder %s15, 4
      %s23 = sphi 0, %s23
      %s25 = sphi 0, %s23
      %s26 = sphi 0, %s25
      %s40 = sphi 0, %s26
      %s46 = sphi 0, %s48
      %s49 = sphi 0, %s46
      %s50 = sphi 0, %s49
      %s66 = sphi 0, %s50
      %s72 = sphi 0, %s74
      %s75 = sphi 0, %s72
      %s76 = sphi 0, %s75
      %s92 = sphi 0, %s76
    $region4: #{tpu_custom_call.1} parent=1 // loop_header_branch
      %18 = sbr.rel (%p16) target = $region8
    $region5: #{tpu_custom_call.1} parent=1 // loop_body
      %s20 = ssub.s32 %s15, 1
      %s21 = ssub.s32 %s15, 2
      %s22 = sadd.s32 %s15, 1
      %s24 = sadd.s32 %s23, 1
      %p27 = scmp.eq.s32.totalorder %s15, 1
      %p28 = scmp.ne.s32.totalorder %s23, %s25
      %p29 = scmp.eq.s32.totalorder %s15, 0
      %p30 = por %p28, %p29
      %p31 = scmp.ne.s32.totalorder %s23, %s25
      %p32 = scmp.eq.s32.totalorder %s20, 1
      %p33 = por %p31, %p32
      %p34 = scmp.ne.s32.totalorder %s25, %s26
      %p35 = scmp.eq.s32.totalorder %s20, 0
      %p36 = por %p34, %p35
      %p37 = scmp.ne.s32.totalorder %s25, %s26
      %p38 = scmp.eq.s32.totalorder %s21, 1
      %p39 = por %p37, %p38
      %p41 = scmp.ne.s32.totalorder %s26, %s40
      %p42 = scmp.eq.s32.totalorder %s21, 0
      %p43 = por %p41, %p42
      %s44 = ssub.s32 %s15, %s22
      %p45 = scmp.eq.s32.totalorder %s44, 0
      %s47 = sadd.s32 %s46, 1
      %s48 = scalar_select %p45, %s46, %s47
      %p51 = pneg %p45
      %p52 = scmp.eq.s32.totalorder %s15, 1
      %p53 = por %p51, %p52
      %p54 = scmp.ne.s32.totalorder %s46, %s49
      %p55 = scmp.eq.s32.totalorder %s15, 0
      %p56 = por %p54, %p55
      %p57 = scmp.ne.s32.totalorder %s46, %s49
      %p58 = scmp.eq.s32.totalorder %s20, 1
      %p59 = por %p57, %p58
      %p60 = scmp.ne.s32.totalorder %s49, %s50
      %p61 = scmp.eq.s32.totalorder %s20, 0
      %p62 = por %p60, %p61
      %p63 = scmp.ne.s32.totalorder %s49, %s50
      %p64 = scmp.eq.s32.totalorder %s21, 1
      %p65 = por %p63, %p64
      %p67 = scmp.ne.s32.totalorder %s50, %s66
      %p68 = scmp.eq.s32.totalorder %s21, 0
      %p69 = por %p67, %p68
      %s70 = ssub.s32 %s15, %s22
      %p71 = scmp.eq.s32.totalorder %s70, 0
      %s73 = sadd.s32 %s72, 1
      %s74 = scalar_select %p71, %s72, %s73
      %p77 = pneg %p71
      %p78 = scmp.eq.s32.totalorder %s15, 1
      %p79 = por %p77, %p78
      %p80 = scmp.ne.s32.totalorder %s72, %s75
      %p81 = scmp.eq.s32.totalorder %s15, 0
      %p82 = por %p80, %p81
      %p83 = scmp.ne.s32.totalorder %s72, %s75
      %p84 = scmp.eq.s32.totalorder %s20, 1
      %p85 = por %p83, %p84
      %p86 = scmp.ne.s32.totalorder %s75, %s76
      %p87 = scmp.eq.s32.totalorder %s20, 0
      %p88 = por %p86, %p87
      %p89 = scmp.ne.s32.totalorder %s75, %s76
      %p90 = scmp.eq.s32.totalorder %s21, 1
      %p91 = por %p89, %p90
      %p93 = scmp.ne.s32.totalorder %s76, %s92
      %p94 = scmp.eq.s32.totalorder %s21, 0
      %p95 = por %p93, %p94
      %p96 = scmp.le.s32.totalorder 1, %s15
      %p97 = scmp.lt.s32.totalorder %s15, 3
      %p98 = pnand %p96, %p97
      %p99 = pneg %p98
      // Predicated region
      $region9: #{tpu_custom_call.1} parent=5 // pred_check
        _
      $region10: #{tpu_custom_call.1} parent=5 // pred_check_branch
        %101 = sbr.rel (%p98) target = $region12
      $region11: #{tpu_custom_call.1} parent=5 // pred_region
        %s102 = ssub.s32 %s15, 1
        // Predicated region
        $region13: #{tpu_custom_call.1} parent=11 // pred_check
          %p103 = pneg %p36
        $region14: #{tpu_custom_call.1} parent=11 // pred_check_branch
          %105 = sbr.rel (%p103) target = $region16
        $region15: #{tpu_custom_call.1} parent=11 // pred_region
          %s107 = ssub.s32 128, 128
          %108 = vsyncadd [#allocation4], %s107
          %s110 = sshll.u32 [#allocation3], 4
          %s111 = int_to_ptr.vmem [resolvable:$true] %s110
          %113 = dma.hbm_to_vmem [thread:$0]  %s0, 128, %s111, [#allocation4]
        $region16: #{tpu_custom_call.1} parent=11 // pred_fallthru
          _
      $region12: #{tpu_custom_call.1} parent=5 // pred_fallthru
        _
      %p114 = scmp.lt.s32.totalorder %s15, 2
      // Predicated region
      $region17: #{tpu_custom_call.1} parent=5 // pred_check
        %p115 = pneg %p114
      $region18: #{tpu_custom_call.1} parent=5 // pred_check_branch
        %117 = sbr.rel (%p115) target = $region20
      $region19: #{tpu_custom_call.1} parent=5 // pred_region
        // Predicated region
        $region21: #{tpu_custom_call.1} parent=19 // pred_check
          %p118 = pneg %p56
        $region22: #{tpu_custom_call.1} parent=19 // pred_check_branch
          %120 = sbr.rel (%p118) target = $region24
        $region23: #{tpu_custom_call.1} parent=19 // pred_region
          %s121 = sand.u32 %s46, 1
          %s122 = scalar_lea.sflag [#allocation7], %s121
          %s123 = sand.u32 %s46, 1
          %s124 = smul.addr %s123, 6
          %s125 = scalar_lea.vmem [#allocation6], %s124
          %s127 = ssub.s32 96, 96
          %128 = vsyncadd %s122, %s127
          %s129 = smul.addr %s15, 3
          %s130 = smul.addr %s129, 32
          %s131 = scalar_lea.hbm %s1, %s130
          %s133 = sshll.u32 %s125, 4
          %s134 = int_to_ptr.vmem [resolvable:$true] %s133
          %136 = dma.hbm_to_vmem [thread:$0]  %s131, 96, %s134, %s122
        $region24: #{tpu_custom_call.1} parent=19 // pred_fallthru
          _
      $region20: #{tpu_custom_call.1} parent=5 // pred_fallthru
        _
      %p137 = scmp.le.s32.totalorder 1, %s15
      %p138 = scmp.lt.s32.totalorder %s15, 3
      %p139 = pnand %p137, %p138
      %p140 = pneg %p139
      // Predicated region
      $region25: #{tpu_custom_call.1} parent=5 // pred_check
        _
      $region26: #{tpu_custom_call.1} parent=5 // pred_check_branch
        %142 = sbr.rel (%p139) target = $region28
      $region27: #{tpu_custom_call.1} parent=5 // pred_region
        %s143 = ssub.s32 %s15, 1
        // Predicated region
        $region29: #{tpu_custom_call.1} parent=27 // pred_check
          %p144 = pneg %p36
        $region30: #{tpu_custom_call.1} parent=27 // pred_check_branch
          %146 = sbr.rel (%p144) target = $region32
        $region31: #{tpu_custom_call.1} parent=27 // pred_region
          %147 = dma.done [#allocation4], 128
        $region32: #{tpu_custom_call.1} parent=27 // pred_fallthru
          _
        %s148 = sand.u32 %s49, 1
        %s149 = scalar_lea.sflag [#allocation7], %s148
        %s150 = sand.u32 %s49, 1
        %s151 = smul.addr %s150, 6
        %s152 = scalar_lea.vmem [#allocation6], %s151
        // Predicated region
        $region33: #{tpu_custom_call.1} parent=27 // pred_check
          %p153 = pneg %p62
        $region34: #{tpu_custom_call.1} parent=27 // pred_check_branch
          %155 = sbr.rel (%p153) target = $region36
        $region35: #{tpu_custom_call.1} parent=27 // pred_region
          %156 = dma.done %s149, 96
        $region36: #{tpu_custom_call.1} parent=27 // pred_fallthru
          _
        %p157 = pneg %p36
        %p158 = pneg %p33
        %s159 = sand.u32 %s49, 1
        %s160 = scalar_lea.sflag [#allocation7], %s159
        %s161 = sand.u32 %s49, 1
        %s162 = smul.addr %s161, 6
        %s163 = scalar_lea.vmem [#allocation6], %s162
        %p164 = pneg %p62
        %p165 = pneg %p59
        %p166 = pneg %p88
        %p167 = pneg %p85
        %s168 = sand.u32 %s75, 1
        %s169 = scalar_lea.sflag [#allocation5], %s168
        %s170 = sand.u32 %s75, 1
        %s171 = smul.addr %s170, 24
        %s172 = scalar_lea.vmem [#allocation8], %s171
        %p174 = scmp.eq.s32.totalorder %s20, 0
        // Predicated region
        $region37: #{tpu_custom_call.1} parent=27 // pred_check
          %p175 = pneg %p174
        $region38: #{tpu_custom_call.1} parent=27 // pred_check_branch
          %177 = sbr.rel (%p175) target = $region40
        $region39: #{tpu_custom_call.1} parent=27 // pred_region
          %178 = vst [vmem:[#allocation2] sm:$0xff] 0
          %179 = vst [vmem:[#allocation2 + $0x8] sm:$0xff] 0
          %vm180 = vcmask 261120
          %181 = vst.msk [vmem:[#allocation2 + $0x10] sm:$0xff] %vm180, 0
          %182 = vst [vmem:[#allocation2 + $0x18] sm:$0xff] 0
          %183 = vst [vmem:[#allocation2 + $0x20] sm:$0xff] 0
          %184 = vst.msk [vmem:[#allocation2 + $0x28] sm:$0xff] %vm180, 0
          %185 = vst [vmem:[#allocation2 + $0x30] sm:$0xff] 0
          %186 = vst [vmem:[#allocation2 + $0x38] sm:$0xff] 0
          %187 = vst.msk [vmem:[#allocation2 + $0x40] sm:$0xff] %vm180, 0
          %188 = vst [vmem:[#allocation2 + $0x48] sm:$0xff] 0
          %189 = vst [vmem:[#allocation2 + $0x50] sm:$0xff] 0
          %190 = vst.msk [vmem:[#allocation2 + $0x58] sm:$0xff] %vm180, 0
          %191 = vst [vmem:[#allocation2 + $0x60] sm:$0xff] 0
          %192 = vst [vmem:[#allocation2 + $0x68] sm:$0xff] 0
          %193 = vst.msk [vmem:[#allocation2 + $0x70] sm:$0xff] %vm180, 0
          %194 = vst [vmem:[#allocation2 + $0x78] sm:$0xff] 0
          %195 = vst [vmem:[#allocation2 + $0x80] sm:$0xff] 0
          %196 = vst.msk [vmem:[#allocation2 + $0x88] sm:$0xff] %vm180, 0
          %197 = vst [vmem:[#allocation2 + $0x90] sm:$0xff] 0
          %198 = vst [vmem:[#allocation2 + $0x98] sm:$0xff] 0
          %199 = vst.msk [vmem:[#allocation2 + $0xa0] sm:$0xff] %vm180, 0
          %200 = vst [vmem:[#allocation2 + $0xa8] sm:$0xff] 0
          %201 = vst [vmem:[#allocation2 + $0xb0] sm:$0xff] 0
          %202 = vst.msk [vmem:[#allocation2 + $0xb8] sm:$0xff] %vm180, 0
          %203 = vst [vmem:[#allocation2 + $0xc0] sm:$0xff] 0
          %204 = vst [vmem:[#allocation2 + $0xc8] sm:$0xff] 0
          %205 = vst.msk [vmem:[#allocation2 + $0xd0] sm:$0xff] %vm180, 0
        $region40: #{tpu_custom_call.1} parent=27 // pred_fallthru
          _
        %v206 = vld [vmem:[%s152] sm:$0x3f]
        %v208 = vcombine.high %v206, %v206
        %v210 = vunpack.c.l.s4 1983009808
        %v211 = vunpack.c.0.s8 %v210
        %v212 = vlaneseq
        %v213 = vshrl.u32 %v212, 7
        %v214 = vsub.s32 %v211, %v213
        %v215 = vrot.slane %v206, %v214
        %v217 = vunpack.c.l.s4 1983009808
        %v218 = vunpack.c.0.s8 %v217
        %v219 = vlaneseq
        %v220 = vshrl.u32 %v219, 7
        %v221 = vsub.s32 %v218, %v220
        %v222 = vrot.slane %v208, %v221
        %v223 = vcombine.high %v215, %v215
        %227 = vst [vmem:[#allocation2] sm:$0x3] %v215
        %228 = vst [vmem:[#allocation2 + $0x8] sm:$0x3] %v223
        %vm229 = vcmask 254976
        %230 = vst.msk [vmem:[#allocation2 + $0x10] sm:$0x3] %vm229, %v222
        %v231 = vld [vmem:[%s152] sm:$0x3f]
        %v233 = vcombine.high %v231, %v231
        %v235 = vunpack.c.l.s4 1983009808
        %v236 = vunpack.c.0.s8 %v235
        %v237 = vlaneseq
        %v238 = vshrl.u32 %v237, 7
        %v239 = vsub.s32 %v236, %v238
        %v240 = vrot.slane %v231, %v239
        %v242 = vunpack.c.l.s4 1983009808
        %v243 = vunpack.c.0.s8 %v242
        %v244 = vlaneseq
        %v245 = vshrl.u32 %v244, 7
        %v246 = vsub.s32 %v243, %v245
        %v247 = vrot.slane %v233, %v246
        %v248 = vcombine.high %v240, %v240
        %249 = vrot.lane.b32.xlu0 %v240, 127
        %v250 = vpop.permute.xlu0 %249
        %251 = vrot.lane.b32.xlu0 %v248, 127
        %v252 = vpop.permute.xlu0 %251
        %253 = vrot.lane.b32.xlu0 %v247, 127
        %v254 = vpop.permute.xlu0 %253
        %vm255 = vcmask 1039360
        %v256 = vsel %vm255, %v250, %v252
        %v257 = vsel %vm255, %v252, %v254
        %261 = vst [vmem:[#allocation2 + $0x18] sm:$0x3] %v256
        %262 = vst [vmem:[#allocation2 + $0x20] sm:$0x3] %v257
        %263 = vst.msk [vmem:[#allocation2 + $0x28] sm:$0x3] %vm229, %v254
        %v264 = vld [vmem:[%s152] sm:$0x3f]
        %v266 = vcombine.high %v264, %v264
        %v268 = vunpack.c.l.s4 1983009808
        %v269 = vunpack.c.0.s8 %v268
        %v270 = vlaneseq
        %v271 = vshrl.u32 %v270, 7
        %v272 = vsub.s32 %v269, %v271
        %v273 = vrot.slane %v264, %v272
        %v275 = vunpack.c.l.s4 1983009808
        %v276 = vunpack.c.0.s8 %v275
        %v277 = vlaneseq
        %v278 = vshrl.u32 %v277, 7
        %v279 = vsub.s32 %v276, %v278
        %v280 = vrot.slane %v266, %v279
        %v281 = vcombine.high %v273, %v273
        %282 = vrot.lane.b32.xlu0 %v273, 126
        %v283 = vpop.permute.xlu0 %282
        %284 = vrot.lane.b32.xlu0 %v281, 126
        %v285 = vpop.permute.xlu0 %284
        %286 = vrot.lane.b32.xlu0 %v280, 126
        %v287 = vpop.permute.xlu0 %286
        %vm288 = vcmask 1031168
        %v289 = vsel %vm288, %v283, %v285
        %v290 = vsel %vm288, %v285, %v287
        %294 = vst [vmem:[#allocation2 + $0x30] sm:$0x3] %v289
        %295 = vst [vmem:[#allocation2 + $0x38] sm:$0x3] %v290
        %296 = vst.msk [vmem:[#allocation2 + $0x40] sm:$0x3] %vm229, %v287
        %v297 = vld [vmem:[%s152] sm:$0x3f]
        %v299 = vcombine.high %v297, %v297
        %v301 = vunpack.c.l.s4 1983009808
        %v302 = vunpack.c.0.s8 %v301
        %v303 = vlaneseq
        %v304 = vshrl.u32 %v303, 7
        %v305 = vsub.s32 %v302, %v304
        %v306 = vrot.slane %v297, %v305
        %v308 = vunpack.c.l.s4 1983009808
        %v309 = vunpack.c.0.s8 %v308
        %v310 = vlaneseq
        %v311 = vshrl.u32 %v310, 7
        %v312 = vsub.s32 %v309, %v311
        %v313 = vrot.slane %v299, %v312
        %v314 = vcombine.high %v306, %v306
        %315 = vrot.lane.b32.xlu0 %v306, 110
        %v316 = vpop.permute.xlu0 %315
        %317 = vrot.lane.b32.xlu0 %v314, 110
        %v318 = vpop.permute.xlu0 %317
        %319 = vrot.lane.b32.xlu0 %v313, 110
        %v320 = vpop.permute.xlu0 %319
        %vm321 = vcmask 900096
        %v322 = vsel %vm321, %v316, %v318
        %v323 = vsel %vm321, %v318, %v320
        %327 = vst [vmem:[#allocation2 + $0x48] sm:$0x3] %v322
        %328 = vst [vmem:[#allocation2 + $0x50] sm:$0x3] %v323
        %329 = vst.msk [vmem:[#allocation2 + $0x58] sm:$0x3] %vm229, %v320
        %v330 = vld [vmem:[%s152] sm:$0x3f]
        %v332 = vcombine.high %v330, %v330
        %v334 = vunpack.c.l.s4 1983009808
        %v335 = vunpack.c.0.s8 %v334
        %v336 = vlaneseq
        %v337 = vshrl.u32 %v336, 7
        %v338 = vsub.s32 %v335, %v337
        %v339 = vrot.slane %v330, %v338
        %v341 = vunpack.c.l.s4 1983009808
        %v342 = vunpack.c.0.s8 %v341
        %v343 = vlaneseq
        %v344 = vshrl.u32 %v343, 7
        %v345 = vsub.s32 %v342, %v344
        %v346 = vrot.slane %v332, %v345
        %v347 = vcombine.high %v339, %v339
        %348 = vrot.lane.b32.xlu0 %v339, 109
        %v349 = vpop.permute.xlu0 %348
        %350 = vrot.lane.b32.xlu0 %v347, 109
        %v351 = vpop.permute.xlu0 %350
        %352 = vrot.lane.b32.xlu0 %v346, 109
        %v353 = vpop.permute.xlu0 %352
        %vm354 = vcmask 891904
        %v355 = vsel %vm354, %v349, %v351
        %v356 = vsel %vm354, %v351, %v353
        %360 = vst [vmem:[#allocation2 + $0x60] sm:$0x3] %v355
        %361 = vst [vmem:[#allocation2 + $0x68] sm:$0x3] %v356
        %362 = vst.msk [vmem:[#allocation2 + $0x70] sm:$0x3] %vm229, %v353
        %v363 = vld [vmem:[%s152] sm:$0x3f]
        %v365 = vcombine.high %v363, %v363
        %v367 = vunpack.c.l.s4 1983009808
        %v368 = vunpack.c.0.s8 %v367
        %v369 = vlaneseq
        %v370 = vshrl.u32 %v369, 7
        %v371 = vsub.s32 %v368, %v370
        %v372 = vrot.slane %v363, %v371
        %v374 = vunpack.c.l.s4 1983009808
        %v375 = vunpack.c.0.s8 %v374
        %v376 = vlaneseq
        %v377 = vshrl.u32 %v376, 7
        %v378 = vsub.s32 %v375, %v377
        %v379 = vrot.slane %v365, %v378
        %v380 = vcombine.high %v372, %v372
        %381 = vrot.lane.b32.xlu0 %v372, 108
        %v382 = vpop.permute.xlu0 %381
        %383 = vrot.lane.b32.xlu0 %v380, 108
        %v384 = vpop.permute.xlu0 %383
        %385 = vrot.lane.b32.xlu0 %v379, 108
        %v386 = vpop.permute.xlu0 %385
        %vm387 = vcmask 883712
        %v388 = vsel %vm387, %v382, %v384
        %v389 = vsel %vm387, %v384, %v386
        %393 = vst [vmem:[#allocation2 + $0x78] sm:$0x3] %v388
        %394 = vst [vmem:[#allocation2 + $0x80] sm:$0x3] %v389
        %395 = vst.msk [vmem:[#allocation2 + $0x88] sm:$0x3] %vm229, %v386
        %v396 = vld [vmem:[%s152] sm:$0x3f]
        %v398 = vcombine.high %v396, %v396
        %v400 = vunpack.c.l.s4 1983009808
        %v401 = vunpack.c.0.s8 %v400
        %v402 = vlaneseq
        %v403 = vshrl.u32 %v402, 7
        %v404 = vsub.s32 %v401, %v403
        %v405 = vrot.slane %v396, %v404
        %v407 = vunpack.c.l.s4 1983009808
        %v408 = vunpack.c.0.s8 %v407
        %v409 = vlaneseq
        %v410 = vshrl.u32 %v409, 7
        %v411 = vsub.s32 %v408, %v410
        %v412 = vrot.slane %v398, %v411
        %v413 = vcombine.high %v405, %v405
        %414 = vrot.lane.b32.xlu0 %v405, 92
        %v415 = vpop.permute.xlu0 %414
        %416 = vrot.lane.b32.xlu0 %v413, 92
        %v417 = vpop.permute.xlu0 %416
        %418 = vrot.lane.b32.xlu0 %v412, 92
        %v419 = vpop.permute.xlu0 %418
        %vm420 = vcmask 752640
        %v421 = vsel %vm420, %v415, %v417
        %v422 = vsel %vm420, %v417, %v419
        %426 = vst [vmem:[#allocation2 + $0x90] sm:$0x3] %v421
        %427 = vst [vmem:[#allocation2 + $0x98] sm:$0x3] %v422
        %428 = vst.msk [vmem:[#allocation2 + $0xa0] sm:$0x3] %vm229, %v419
        %v429 = vld [vmem:[%s152] sm:$0x3f]
        %v431 = vcombine.high %v429, %v429
        %v433 = vunpack.c.l.s4 1983009808
        %v434 = vunpack.c.0.s8 %v433
        %v435 = vlaneseq
        %v436 = vshrl.u32 %v435, 7
        %v437 = vsub.s32 %v434, %v436
        %v438 = vrot.slane %v429, %v437
        %v440 = vunpack.c.l.s4 1983009808
        %v441 = vunpack.c.0.s8 %v440
        %v442 = vlaneseq
        %v443 = vshrl.u32 %v442, 7
        %v444 = vsub.s32 %v441, %v443
        %v445 = vrot.slane %v431, %v444
        %v446 = vcombine.high %v438, %v438
        %447 = vrot.lane.b32.xlu0 %v438, 91
        %v448 = vpop.permute.xlu0 %447
        %449 = vrot.lane.b32.xlu0 %v446, 91
        %v450 = vpop.permute.xlu0 %449
        %451 = vrot.lane.b32.xlu0 %v445, 91
        %v452 = vpop.permute.xlu0 %451
        %vm453 = vcmask 744448
        %v454 = vsel %vm453, %v448, %v450
        %v455 = vsel %vm453, %v450, %v452
        %459 = vst [vmem:[#allocation2 + $0xa8] sm:$0x3] %v454
        %460 = vst [vmem:[#allocation2 + $0xb0] sm:$0x3] %v455
        %461 = vst.msk [vmem:[#allocation2 + $0xb8] sm:$0x3] %vm229, %v452
        %v462 = vld [vmem:[%s152] sm:$0x3f]
        %v464 = vcombine.high %v462, %v462
        %v466 = vunpack.c.l.s4 1983009808
        %v467 = vunpack.c.0.s8 %v466
        %v468 = vlaneseq
        %v469 = vshrl.u32 %v468, 7
        %v470 = vsub.s32 %v467, %v469
        %v471 = vrot.slane %v462, %v470
        %v473 = vunpack.c.l.s4 1983009808
        %v474 = vunpack.c.0.s8 %v473
        %v475 = vlaneseq
        %v476 = vshrl.u32 %v475, 7
        %v477 = vsub.s32 %v474, %v476
        %v478 = vrot.slane %v464, %v477
        %v479 = vcombine.high %v471, %v471
        %480 = vrot.lane.b32.xlu0 %v471, 90
        %v481 = vpop.permute.xlu0 %480
        %482 = vrot.lane.b32.xlu0 %v479, 90
        %v483 = vpop.permute.xlu0 %482
        %484 = vrot.lane.b32.xlu0 %v478, 90
        %v485 = vpop.permute.xlu0 %484
        %vm486 = vcmask 736256
        %v487 = vsel %vm486, %v481, %v483
        %v488 = vsel %vm486, %v483, %v485
        %492 = vst [vmem:[#allocation2 + $0xc0] sm:$0x3] %v487
        %493 = vst [vmem:[#allocation2 + $0xc8] sm:$0x3] %v488
        %494 = vst.msk [vmem:[#allocation2 + $0xd0] sm:$0x3] %vm229, %v485
        %v495 = vld [vmem:[#allocation3] sm:$0xff]
        %v496 = vld [vmem:[#allocation2] sm:$0xff]
        %v497 = vld [vmem:[#allocation2 + $0x8] sm:$0xff]
        %v498 = vld [vmem:[#allocation2 + $0x10] sm:$0xff]
        %v499 = vld [vmem:[#allocation2 + $0x18] sm:$0xff]
        %v500 = vld [vmem:[#allocation2 + $0x20] sm:$0xff]
        %v501 = vld [vmem:[#allocation2 + $0x28] sm:$0xff]
        %v502 = vld [vmem:[#allocation2 + $0x30] sm:$0xff]
        %v503 = vld [vmem:[#allocation2 + $0x38] sm:$0xff]
        %v504 = vld [vmem:[#allocation2 + $0x40] sm:$0xff]
        %v505 = vld [vmem:[#allocation2 + $0x48] sm:$0xff]
        %v506 = vld [vmem:[#allocation2 + $0x50] sm:$0xff]
        %v507 = vld [vmem:[#allocation2 + $0x58] sm:$0xff]
        %v508 = vld [vmem:[#allocation2 + $0x60] sm:$0xff]
        %v509 = vld [vmem:[#allocation2 + $0x68] sm:$0xff]
        %v510 = vld [vmem:[#allocation2 + $0x70] sm:$0xff]
        %v511 = vld [vmem:[#allocation2 + $0x78] sm:$0xff]
        %v512 = vld [vmem:[#allocation2 + $0x80] sm:$0xff]
        %v513 = vld [vmem:[#allocation2 + $0x88] sm:$0xff]
        %v514 = vld [vmem:[#allocation2 + $0x90] sm:$0xff]
        %v515 = vld [vmem:[#allocation2 + $0x98] sm:$0xff]
        %v516 = vld [vmem:[#allocation2 + $0xa0] sm:$0xff]
        %v517 = vld [vmem:[#allocation2 + $0xa8] sm:$0xff]
        %v518 = vld [vmem:[#allocation2 + $0xb0] sm:$0xff]
        %v519 = vld [vmem:[#allocation2 + $0xb8] sm:$0xff]
        %v520 = vld [vmem:[#allocation2 + $0xc0] sm:$0xff]
        %v521 = vld [vmem:[#allocation2 + $0xc8] sm:$0xff]
        %v522 = vld [vmem:[#allocation2 + $0xd0] sm:$0xff]
        %v524 = vunpack.c.l.b16 %v495
        %v525 = vunpack.c.h.b16 %v495
        %v526 = vpack.c.b16 %v524, %v524
        %v527 = vpack.c.b16 %v525, %v525
        %vm529 = vcmask 130048
        %v531 = vsel %vm529, %v527, 0
        %533 = vmatprep.subr.bf16.mxu0 %v497
        %534 = vmatpush1.bf16.msra.mxu0 %v496
        %535 = vmatprep.subr.bf16.mxu0 %v500
        %536 = vmatpush1.bf16.msra.mxu0 %v499
        %537 = vmatprep.subr.bf16.mxu0 %v503
        %538 = vmatpush1.bf16.msra.mxu0 %v502
        %539 = vmatprep.subr.bf16.mxu0 %v506
        %540 = vmatpush1.bf16.msra.mxu0 %v505
        %541 = vmatprep.subr.bf16.mxu0 %v509
        %542 = vmatpush1.bf16.msra.mxu0 %v508
        %543 = vmatprep.subr.bf16.mxu0 %v512
        %544 = vmatpush1.bf16.msra.mxu0 %v511
        %545 = vmatprep.subr.bf16.mxu0 %v515
        %546 = vmatpush1.bf16.msra.mxu0 %v514
        %547 = vmatprep.subr.bf16.mxu0 %v518
        %548 = vmatpush1.bf16.msra.mxu0 %v517
        %549 = vmatprep.subr.bf16.mxu0 %v521
        %550 = vmatpush1.bf16.msra.mxu0 %v520
        %551 = vmatprep.subr.bf16.mxu0 0
        %552 = vmatpush1.bf16.msra.mxu0 0
        %553 = vmatprep.subr.bf16.mxu0 0
        %554 = vmatpush1.bf16.msra.mxu0 0
        %555 = vmatprep.subr.bf16.mxu0 0
        %556 = vmatpush1.bf16.msra.mxu0 0
        %557 = vmatprep.subr.bf16.mxu0 0
        %558 = vmatpush1.bf16.msra.mxu0 0
        %559 = vmatprep.subr.bf16.mxu0 0
        %560 = vmatpush1.bf16.msra.mxu0 0
        %561 = vmatprep.subr.bf16.mxu0 0
        %562 = vmatpush1.bf16.msra.mxu0 0
        %563 = vmatprep.subr.bf16.mxu0 0
        %564 = vmatpush1.bf16.msra.mxu0 0
        %565 = vmatprep.mubr.bf16.mxu0 %v531
        %566 = vmatmul.mubr.bf16.gmra.mrb[0].mxu0 %v526
        %v567 = vpop.f32.mrb[0].mxu0
        %v568 = vadd.f32 0.0, %v567
        %v569 = vpop.f32.mrb[0].mxu0
        %v570 = vadd.f32 0.0, %v569
        %v571 = vpop.f32.mrb[0].mxu0
        %v572 = vpop.f32.mrb[0].mxu0
        %573 = vdwg.mxu0
        %574 = vmatprep.subr.bf16.mxu0 0
        %575 = vmatpush1.bf16.msra.mxu0 %v498
        %576 = vmatprep.subr.bf16.mxu0 0
        %577 = vmatpush1.bf16.msra.mxu0 %v501
        %578 = vmatprep.subr.bf16.mxu0 0
        %579 = vmatpush1.bf16.msra.mxu0 %v504
        %580 = vmatprep.subr.bf16.mxu0 0
        %581 = vmatpush1.bf16.msra.mxu0 %v507
        %582 = vmatprep.subr.bf16.mxu0 0
        %583 = vmatpush1.bf16.msra.mxu0 %v510
        %584 = vmatprep.subr.bf16.mxu0 0
        %585 = vmatpush1.bf16.msra.mxu0 %v513
        %586 = vmatprep.subr.bf16.mxu0 0
        %587 = vmatpush1.bf16.msra.mxu0 %v516
        %588 = vmatprep.subr.bf16.mxu0 0
        %589 = vmatpush1.bf16.msra.mxu0 %v519
        %590 = vmatprep.subr.bf16.mxu0 0
        %591 = vmatpush1.bf16.msra.mxu0 %v522
        %592 = vmatprep.subr.bf16.mxu0 0
        %593 = vmatpush1.bf16.msra.mxu0 0
        %594 = vmatprep.subr.bf16.mxu0 0
        %595 = vmatpush1.bf16.msra.mxu0 0
        %596 = vmatprep.subr.bf16.mxu0 0
        %597 = vmatpush1.bf16.msra.mxu0 0
        %598 = vmatprep.subr.bf16.mxu0 0
        %599 = vmatpush1.bf16.msra.mxu0 0
        %600 = vmatprep.subr.bf16.mxu0 0
        %601 = vmatpush1.bf16.msra.mxu0 0
        %602 = vmatprep.subr.bf16.mxu0 0
        %603 = vmatpush1.bf16.msra.mxu0 0
        %604 = vmatprep.subr.bf16.mxu0 0
        %605 = vmatpush1.bf16.msra.mxu0 0
        %606 = vmatprep.mubr.bf16.mxu0 %v531
        %607 = vmatmul.mubr.bf16.gmra.mrb[0].mxu0 %v526
        %v608 = vpop.f32.mrb[0].mxu0
        %v609 = vadd.f32 0.0, %v608
        %v610 = vpop.f32.mrb[0].mxu0
        %v611 = vpop.f32.mrb[0].mxu0
        %v612 = vpop.f32.mrb[0].mxu0
        %613 = vdwg.mxu0
        %614 = vst [vmem:[%s172] sm:$0xff] %v568
        %615 = vst [vmem:[%s172 + $0x8] sm:$0xff] %v570
        %vm616 = vcmask 261120
        %617 = vst.msk [vmem:[%s172 + $0x10] sm:$0xff] %vm616, %v609
        %s618 = sand.u32 %s75, 1
        %s619 = scalar_lea.sflag [#allocation5], %s618
        %s620 = sand.u32 %s75, 1
        %s621 = smul.addr %s620, 24
        %s622 = scalar_lea.vmem [#allocation8], %s621
        // Predicated region
        $region41: #{tpu_custom_call.1} parent=27 // pred_check
          %p623 = pneg %p85
        $region42: #{tpu_custom_call.1} parent=27 // pred_check_branch
          %625 = sbr.rel (%p623) target = $region44
        $region43: #{tpu_custom_call.1} parent=27 // pred_region
          %s627 = ssub.s32 384, 384
          %628 = vsyncadd %s619, %s627
          %s629 = smul.addr %s20, 3
          %s630 = smul.addr %s629, 128
          %s631 = scalar_lea.hbm %s2, %s630
          %s633 = sshll.u32 %s622, 4
          %s634 = int_to_ptr.vmem [resolvable:$true] %s633
          %636 = dma.vmem_to_hbm [thread:$0]  %s634, 384, %s631, %s619
        $region44: #{tpu_custom_call.1} parent=27 // pred_fallthru
          _
      $region28: #{tpu_custom_call.1} parent=5 // pred_fallthru
        _
      %p637 = scmp.le.s32.totalorder 2, %s15
      // Predicated region
      $region45: #{tpu_custom_call.1} parent=5 // pred_check
        %p638 = pneg %p637
      $region46: #{tpu_custom_call.1} parent=5 // pred_check_branch
        %640 = sbr.rel (%p638) target = $region48
      $region47: #{tpu_custom_call.1} parent=5 // pred_region
        %s641 = ssub.s32 %s15, 2
        // Predicated region
        $region49: #{tpu_custom_call.1} parent=47 // pred_check
          %p642 = pneg %p91
        $region50: #{tpu_custom_call.1} parent=47 // pred_check_branch
          %644 = sbr.rel (%p642) target = $region52
        $region51: #{tpu_custom_call.1} parent=47 // pred_region
          %s645 = sand.u32 %s76, 1
          %s646 = scalar_lea.sflag [#allocation5], %s645
          %s647 = sand.u32 %s76, 1
          %s648 = smul.addr %s647, 24
          %s649 = scalar_lea.vmem [#allocation8], %s648
          %650 = dma.done %s646, 384
        $region52: #{tpu_custom_call.1} parent=47 // pred_fallthru
          _
      $region48: #{tpu_custom_call.1} parent=5 // pred_fallthru
        _
    $region6: #{tpu_custom_call.1} parent=1 // loop_footer
      %s19 = sadd.s32 1, %s15
    $region7: #{tpu_custom_call.1} parent=1 // loop_footer_branch
      %14 = sbr.rel target = $region3
    $region8: #{tpu_custom_call.1} parent=1 // loop_exit
      _
    %651 = vsyncpa [#allocation4], 1
    %s652 = scalar_lea.sflag [#allocation4], 1
    %653 = vsyncpa %s652, 1
    %654 = vsyncpa [#allocation7], 1
    %s655 = scalar_lea.sflag [#allocation7], 1
    %656 = vsyncpa %s655, 1
    %657 = vsyncpa [#allocation5], 1
    %s658 = scalar_lea.sflag [#allocation5], 1
    %659 = vsyncpa %s658, 1

</llo_original>
